<compile_context>
chip_gen: v7x
topology: tpu7x:2x2x1
jax: 0.10.0
libtpu: 0.0.40
codegen_flags: <defaults>
</compile_context>

<pallas_src>
import functools

import jax
import jax.numpy as jnp
from jax.experimental import pallas as pl
from jax.experimental.pallas import tpu as pltpu

_LANE = 128    # lane width of a vreg
_CHUNK = 512   # lanes processed per inner step; (H=32, 512) f32 == 16 vregs


def _mlp_fused_kernel(x_ref, w1_ref, bh_ref, wo_ref, bo_ref, *rest,
                      num_hidden, chunk, num_chunks):
    """Whole MLP forward on one lane-dense batch tile.

      x_ref  : (1, TN)             input batch tile (batch on lanes)
      w1_ref : (H, 1)              first-layer weight column (PyTorch (out, in))
      bh_ref : (num_hidden, H, 1)  all hidden-layer biases, stacked
      wo_ref : (H, 1)              output-layer weight column
      bo_ref : (1, 1)              output-layer bias
      rest   : (wrest_ref?, o_ref)
                 wrest_ref: (num_hidden - 1, H, H) remaining hidden weights
                 o_ref    : (1, TN) output tile
    """
    o_ref = rest[-1]
    wrest_ref = rest[0] if num_hidden > 1 else None

    # Hoist the VMEM-resident parameter loads out of the chunk loop.
    w1 = w1_ref[...]          # (H, 1)
    b1 = bh_ref[0]            # (H, 1)
    wo = wo_ref[...]          # (H, 1)
    bo = bo_ref[...]          # (1, 1)

    # Inner lane-chunk loop over the (1, TN) tile.  num_chunks is a small
    # static count, so a fully-unrolled static loop (equivalent to
    # lax.fori_loop(..., unroll=True)) gives the LLO scheduler full visibility
    # while every pl.ds start is a compile-time constant aligned to `chunk`.
    for c in range(num_chunks):
        start = c * chunk
        x = x_ref[:, pl.ds(start, chunk)]                    # (1, chunk)

        # Layer 1 (in_features == 1): outer product on the VPU, no MXU pass.
        h = jnp.maximum(w1 * x + b1, 0.0)                    # (H, chunk)

        # Remaining hidden layers: (H, H) @ (H, chunk) on the MXU.
        # (Static Python loop: num_hidden is tiny here; switch to
        #  lax.fori_loop with dynamic wrest_ref[k] indexing for deep MLPs.)
        for k in range(1, num_hidden):
            w = wrest_ref[k - 1]                             # (H, H), (out, in)
            h = jnp.dot(w, h, preferred_element_type=jnp.float32) + bh_ref[k]
            h = jnp.maximum(h, 0.0)

        # Output layer (out_features == 1): sublane (XLU) reduction instead of
        # a degenerate (H, chunk) x (H, 1) matmul; EUP handles the sigmoid.
        y = jnp.sum(wo * h, axis=0, keepdims=True) + bo      # (1, chunk)
        o_ref[:, pl.ds(start, chunk)] = jax.nn.sigmoid(y).astype(o_ref.dtype)


def mlp_forward(x, params, *, max_block_n=8192):
    """Fused Pallas MLP forward. x: (N, 1); params in PyTorch (out, in) layout."""
    n = x.shape[0]
    num_hidden = len(params) - 1
    assert num_hidden >= 1, "MLP requires at least one hidden layer"
    hidden = params[0][0].shape[0]
    assert max_block_n % _CHUNK == 0 and max_block_n >= _CHUNK, (
        "max_block_n must be a positive multiple of %d" % _CHUNK)

    # Kernel-layout parameters (all tiny; layout plumbing happens here, once).
    w1 = params[0][0].reshape(hidden, 1)                         # (H, 1)
    b_hidden = jnp.stack([b for (_, b) in params[:-1]], axis=0)
    b_hidden = b_hidden.reshape(num_hidden, hidden, 1)           # (L, H, 1)
    w_out, b_out = params[-1]
    wo = w_out.reshape(hidden, 1)                                # (H, 1)
    bo = b_out.reshape(1, 1)                                     # (1, 1)

    extra_args = []
    extra_specs = []
    if num_hidden > 1:
        w_rest = jnp.stack([w for (w, _) in params[1:-1]], axis=0)   # (L-1, H, H)
        extra_args.append(w_rest)
        extra_specs.append(
            pl.BlockSpec((num_hidden - 1, hidden, hidden), lambda i: (0, 0, 0)))

    # Tile selection: biggest lane tile up to max_block_n (amortizes per-step
    # overhead), processed internally in _CHUNK-lane pieces.  max_block_n is
    # kept <= 8192 so large batches still produce several grid steps (keeps
    # both v7x TensorCores busy) and VMEM stays ~1 MiB on all generations.
    n_lanes = pl.cdiv(n, _LANE) * _LANE
    if n_lanes >= _CHUNK:
        tn = min(max_block_n, pl.cdiv(n_lanes, _CHUNK) * _CHUNK)
        chunk = _CHUNK
    else:
        tn = n_lanes
        chunk = n_lanes
    num_chunks = tn // chunk
    n_tiles = pl.cdiv(n, tn)

    # Lane-dense batch layout with NO wrapper-side pad: the ragged tail is
    # handled by Pallas partial blocks (garbage lanes are computed and then
    # sliced off below).  Avoids an extra HBM read+write of the whole batch.
    x_row = x.reshape(1, n)

    in_specs = [
        pl.BlockSpec((1, tn), lambda i: (0, i)),                      # x tile
        pl.BlockSpec((hidden, 1), lambda i: (0, 0)),                  # w1 (resident)
        pl.BlockSpec((num_hidden, hidden, 1), lambda i: (0, 0, 0)),   # hidden biases
        pl.BlockSpec((hidden, 1), lambda i: (0, 0)),                  # wo
        pl.BlockSpec((1, 1), lambda i: (0, 0)),                       # bo
    ] + extra_specs

    # Advisory cost estimate: forward flops, one transcendental (sigmoid) per
    # element, 8 B/element of HBM streaming plus the (once-resident) weights.
    param_bytes = 4 * (hidden                         # w1
                       + num_hidden * hidden          # hidden biases
                       + (num_hidden - 1) * hidden * hidden
                       + hidden + 1)                  # wo, bo
    cost = pl.CostEstimate(
        flops=n * (4 * hidden + 2 * hidden * hidden * (num_hidden - 1)),
        transcendentals=n,
        bytes_accessed=8 * n + param_bytes,
    )

    out = pl.pallas_call(
        functools.partial(_mlp_fused_kernel, num_hidden=num_hidden,
                          chunk=chunk, num_chunks=num_chunks),
        out_shape=jax.ShapeDtypeStruct((1, n), jnp.float32),
        grid_spec=pltpu.PrefetchScalarGridSpec(
            num_scalar_prefetch=0,
            grid=(n_tiles,),
            in_specs=in_specs,
            out_specs=pl.BlockSpec((1, tn), lambda i: (0, i)),
        ),
        compiler_params=pltpu.CompilerParams(
            dimension_semantics=("parallel",)),
        cost_estimate=cost,
    )(x_row, w1, b_hidden, wo, bo, *extra_args)

    return out.reshape(n, 1)


def init_mlp_params(key, hidden_size=32, num_layers=1):
    """Deterministic synthetic init in PyTorch nn.Linear layout: W (out, in), b (out,)."""
    params = []
    dims = [1] + [hidden_size] * num_layers + [1]
    for i in range(len(dims) - 1):
        fan_in, fan_out = dims[i], dims[i + 1]
        key, kw, kb = jax.random.split(key, 3)
        bound = 1.0 / jnp.sqrt(jnp.float32(fan_in))
        w = jax.random.uniform(kw, (fan_out, fan_in), jnp.float32, -bound, bound)
        b = jax.random.uniform(kb, (fan_out,), jnp.float32, -bound, bound)
        params.append((w, b))
    return params


def mlp_forward_ref(x, params):
    """Pure-JAX reference (PyTorch semantics: x @ W^T + b)."""
    h = x
    for w, b in params[:-1]:
        h = jnp.maximum(h @ w.T + b[None, :], 0.0)
    w_out, b_out = params[-1]
    return jax.nn.sigmoid(h @ w_out.T + b_out[None, :])


if __name__ == "__main__":
    key = jax.random.PRNGKey(0)
    k_x, k_p, k_x2, k_p2, k_x3, k_p3 = jax.random.split(key, 6)

    # Small config consistent with the module (scaled-down hidden size).
    batch, hidden_size, num_layers = 8, 32, 2
    x = jax.random.normal(k_x, (batch, 1), jnp.float32)
    params = init_mlp_params(k_p, hidden_size=hidden_size, num_layers=num_layers)
    out = jax.block_until_ready(mlp_forward(x, params))
    ref = mlp_forward_ref(x, params)
    assert out.shape == (batch, 1), out.shape
    assert jnp.allclose(out, ref, atol=1e-5, rtol=1e-5), (out, ref)

    # Exercise the single-hidden-layer path + the inner multi-chunk loop.
    batch2 = 640
    x2 = jax.random.normal(k_x2, (batch2, 1), jnp.float32)
    params2 = init_mlp_params(k_p2, hidden_size=hidden_size, num_layers=1)
    out2 = jax.block_until_ready(mlp_forward(x2, params2))
    ref2 = mlp_forward_ref(x2, params2)
    assert out2.shape == (batch2, 1), out2.shape
    assert jnp.allclose(out2, ref2, atol=1e-5, rtol=1e-5)

    # Exercise the multi-tile parallel grid with a ragged (partial) last block
    # (small max_block_n override keeps the test tiny).
    batch3 = 1300
    x3 = jax.random.normal(k_x3, (batch3, 1), jnp.float32)
    params3 = init_mlp_params(k_p3, hidden_size=hidden_size, num_layers=2)
    out3 = jax.block_until_ready(mlp_forward(x3, params3, max_block_n=512))
    ref3 = mlp_forward_ref(x3, params3)
    assert out3.shape == (batch3, 1), out3.shape
    assert jnp.allclose(out3, ref3, atol=1e-5, rtol=1e-5)

    print("KERNEL_OK")
</pallas_src>

<mosaic_0001>
module attributes {stable_mosaic.version = 11 : i64} {
  func.func @_mlp_fused_kernel(%arg0: i32, %arg1: memref<1x128xf32, #tpu.memory_space<vmem>>, %arg2: memref<32x1xf32, #tpu.memory_space<vmem>>, %arg3: memref<2x32x1xf32, #tpu.memory_space<vmem>>, %arg4: memref<32x1xf32, #tpu.memory_space<vmem>>, %arg5: memref<1x1xf32, #tpu.memory_space<vmem>>, %arg6: memref<1x32x32xf32, #tpu.memory_space<vmem>>, %arg7: memref<1x128xf32, #tpu.memory_space<vmem>>) attributes {dimension_semantics = [#tpu.dimension_semantics<parallel>], iteration_bounds = array<i64: 1>, scalar_prefetch = 0 : i64, scratch_operands = 0 : i64, tpu.core_type = #tpu.core_type<tc>, window_params = [{transform_indices = @transform_0, window_bounds = array<i64: 1, 128>}, {pipeline_mode = #tpu.pipeline_mode<synchronous>, transform_indices = @transform_1, window_bounds = array<i64: 32, 1>}, {pipeline_mode = #tpu.pipeline_mode<synchronous>, transform_indices = @transform_2, window_bounds = array<i64: 2, 32, 1>}, {pipeline_mode = #tpu.pipeline_mode<synchronous>, transform_indices = @transform_3, window_bounds = array<i64: 32, 1>}, {pipeline_mode = #tpu.pipeline_mode<synchronous>, transform_indices = @transform_4, window_bounds = array<i64: 1, 1>}, {pipeline_mode = #tpu.pipeline_mode<synchronous>, transform_indices = @transform_5, window_bounds = array<i64: 1, 32, 32>}, {transform_indices = @transform_6, window_bounds = array<i64: 1, 128>}]} {
    %c0 = arith.constant 0 : index
    %c0_0 = arith.constant 0 : index
    %0 = vector.load %arg2[%c0, %c0_0] : memref<32x1xf32, #tpu.memory_space<vmem>>, vector<32x1xf32>
    %c0_1 = arith.constant 0 : index
    %c0_2 = arith.constant 0 : index
    %c0_3 = arith.constant 0 : index
    %1 = vector.load %arg3[%c0_1, %c0_2, %c0_3] : memref<2x32x1xf32, #tpu.memory_space<vmem>>, vector<1x32x1xf32>
    %2 = vector.shape_cast %1 : vector<1x32x1xf32> to vector<32x1xf32>
    %c0_4 = arith.constant 0 : index
    %c0_5 = arith.constant 0 : index
    %3 = vector.load %arg4[%c0_4, %c0_5] : memref<32x1xf32, #tpu.memory_space<vmem>>, vector<32x1xf32>
    %c0_6 = arith.constant 0 : index
    %c0_7 = arith.constant 0 : index
    %4 = vector.load %arg5[%c0_6, %c0_7] : memref<1x1xf32, #tpu.memory_space<vmem>>, vector<1x1xf32>
    %c0_8 = arith.constant 0 : index
    %c0_9 = arith.constant 0 : index
    %5 = vector.load %arg1[%c0_8, %c0_9] : memref<1x128xf32, #tpu.memory_space<vmem>>, vector<1x128xf32>
    %6 = vector.broadcast %0 : vector<32x1xf32> to vector<32x128xf32>
    %7 = vector.broadcast %5 : vector<1x128xf32> to vector<32x128xf32>
    %8 = arith.mulf %6, %7 : vector<32x128xf32>
    %9 = vector.broadcast %2 : vector<32x1xf32> to vector<32x128xf32>
    %10 = arith.addf %8, %9 : vector<32x128xf32>
    %cst = arith.constant 0.000000e+00 : f32
    %11 = vector.broadcast %cst : f32 to vector<32x128xf32>
    %12 = arith.maximumf %10, %11 : vector<32x128xf32>
    %c0_10 = arith.constant 0 : index
    %c0_11 = arith.constant 0 : index
    %c0_12 = arith.constant 0 : index
    %13 = vector.load %arg6[%c0_10, %c0_11, %c0_12] : memref<1x32x32xf32, #tpu.memory_space<vmem>>, vector<1x32x32xf32>
    %14 = vector.shape_cast %13 : vector<1x32x32xf32> to vector<32x32xf32>
    %cst_13 = arith.constant dense<0.000000e+00> : vector<32x128xf32>
    %15 = tpu.matmul %14, %12, %cst_13 {dimension_numbers = #tpu.dot_dimension_numbers<[1], [0], [0], [1], [0, 0, 1, 1], [], []>} : vector<32x32xf32>, vector<32x128xf32>, vector<32x128xf32> -> vector<32x128xf32>
    %c1 = arith.constant 1 : index
    %c0_14 = arith.constant 0 : index
    %c0_15 = arith.constant 0 : index
    %16 = vector.load %arg3[%c1, %c0_14, %c0_15] : memref<2x32x1xf32, #tpu.memory_space<vmem>>, vector<1x32x1xf32>
    %17 = vector.shape_cast %16 : vector<1x32x1xf32> to vector<32x1xf32>
    %18 = vector.broadcast %17 : vector<32x1xf32> to vector<32x128xf32>
    %19 = arith.addf %15, %18 : vector<32x128xf32>
    %cst_16 = arith.constant 0.000000e+00 : f32
    %20 = vector.broadcast %cst_16 : f32 to vector<32x128xf32>
    %21 = arith.maximumf %19, %20 : vector<32x128xf32>
    %22 = vector.broadcast %3 : vector<32x1xf32> to vector<32x128xf32>
    %23 = arith.mulf %22, %21 : vector<32x128xf32>
    %cst_17 = arith.constant dense<0.000000e+00> : vector<128xf32>
    %24 = vector.multi_reduction <add>, %23, %cst_17 [0] : vector<32x128xf32> to vector<128xf32>
    %25 = vector.shape_cast %24 : vector<128xf32> to vector<1x128xf32>
    %26 = vector.broadcast %4 : vector<1x1xf32> to vector<1x128xf32>
    %27 = arith.addf %25, %26 : vector<1x128xf32>
    %28 = arith.negf %27 : vector<1x128xf32>
    %29 = math.exp %28 : vector<1x128xf32>
    %cst_18 = arith.constant 1.000000e+00 : f32
    %30 = vector.broadcast %cst_18 : f32 to vector<1x128xf32>
    %31 = arith.addf %30, %29 : vector<1x128xf32>
    %32 = arith.divf %30, %31 : vector<1x128xf32>
    %c0_19 = arith.constant 0 : index
    %c0_20 = arith.constant 0 : index
    %33 = vector.load %arg7[%c0_19, %c0_20] : memref<1x128xf32, #tpu.memory_space<vmem>>, vector<1x128xf32>
    tpu.vector_store %arg7[%c0_19, %c0_20], %32 {strides = array<i32>} : memref<1x128xf32, #tpu.memory_space<vmem>>, vector<1x128xf32>,
    return
  }
  func.func @transform_0(%arg0: i32) -> (i32, i32) {
    %c0_i32 = arith.constant 0 : i32
    %c0_i32_0 = arith.constant 0 : i32
    return %c0_i32, %arg0 : i32, i32
  }
  func.func @transform_1(%arg0: i32) -> (i32, i32) {
    %c0_i32 = arith.constant 0 : i32
    %c0_i32_0 = arith.constant 0 : i32
    %c0_i32_1 = arith.constant 0 : i32
    return %c0_i32, %c0_i32_0 : i32, i32
  }
  func.func @transform_2(%arg0: i32) -> (i32, i32, i32) {
    %c0_i32 = arith.constant 0 : i32
    %c0_i32_0 = arith.constant 0 : i32
    %c0_i32_1 = arith.constant 0 : i32
    %c0_i32_2 = arith.constant 0 : i32
    return %c0_i32, %c0_i32_0, %c0_i32_1 : i32, i32, i32
  }
  func.func @transform_3(%arg0: i32) -> (i32, i32) {
    %c0_i32 = arith.constant 0 : i32
    %c0_i32_0 = arith.constant 0 : i32
    %c0_i32_1 = arith.constant 0 : i32
    return %c0_i32, %c0_i32_0 : i32, i32
  }
  func.func @transform_4(%arg0: i32) -> (i32, i32) {
    %c0_i32 = arith.constant 0 : i32
    %c0_i32_0 = arith.constant 0 : i32
    %c0_i32_1 = arith.constant 0 : i32
    return %c0_i32, %c0_i32_0 : i32, i32
  }
  func.func @transform_5(%arg0: i32) -> (i32, i32, i32) {
    %c0_i32 = arith.constant 0 : i32
    %c0_i32_0 = arith.constant 0 : i32
    %c0_i32_1 = arith.constant 0 : i32
    %c0_i32_2 = arith.constant 0 : i32
    return %c0_i32, %c0_i32_0, %c0_i32_1 : i32, i32, i32
  }
  func.func @transform_6(%arg0: i32) -> (i32, i32) {
    %c0_i32 = arith.constant 0 : i32
    %c0_i32_0 = arith.constant 0 : i32
    return %c0_i32, %arg0 : i32, i32
  }
}

</mosaic_0001>

<llo_original>
// kernel: tpu_custom_call.1
$region0: #{tpu_custom_call.1}
  #allocation0 [shape = 'u32[]', space=smem, size = 0x4, offset = 0x4, fixed_abs, tag = 'smem constant byte address 0x4 - core index']
  #allocation1 [shape = 'u32[144,128]{1,0:T(1,128)}', space=vmem, size = 0x12000, scoped, tag = 'internal scratch']
  #allocation2 [shape = 'f32[1,1]{1,0:T(1,128)S(1)}', space=vmem, size = 0x200, scoped, tag = 'scoped memory for tpu_custom_call.1']
  %s0 = inlined_call_operand.vmem [shape: f32[1,8], index: 0, kind: input, shape index: {}]
  %s1 = inlined_call_operand.vmem [shape: f32[32,1], index: 1, kind: input, shape index: {}]
  %s2 = inlined_call_operand.vmem [shape: f32[2,32,1], index: 2, kind: input, shape index: {}]
  %s3 = inlined_call_operand.vmem [shape: f32[32,1], index: 3, kind: input, shape index: {}]
  %s4 = inlined_call_operand.<no memory space> [shape: f32[1,1], index: 4, kind: input, shape index: {}]
  %s5 = inlined_call_operand.vmem [shape: f32[1,32,32], index: 5, kind: input, shape index: {}]
  %s6 = inlined_call_operand.hbm [shape: f32[1,8], index: 6, kind: output, shape index: {}]
  %s7 = sld [smem:[#allocation0]]
  $region34: #{tpu_custom_call.1} parent=0
    _
  %s9 = ssub.s32 1, %s7
  %s10 = scalar_select 0, %s9, %s7
  %v11 = vstv %s4
  %12 = vst [vmem:[#allocation2] sm:$0x1] %v11
  $region1: #{tpu_custom_call.1} parent=0
    #allocation3 [shape = 'u8[512]{0}', space=vmem, size = 0x400, scoped, tag = 'output window, operand 0, single buffered']
    #allocation4 [shape = 's32[1]{0}', space=sflag, size = 0x4, scoped, tag = 'scoped memory for tpu_custom_call.1']
    %13 = vsyncpa [#allocation4], 0
    // Predicated region
    $region2: #{tpu_custom_call.1} parent=1 // pred_check
      _
    $region3: #{tpu_custom_call.1} parent=1 // pred_check_branch
      %15 = sbr.rel (0) target = $region5
    $region4: #{tpu_custom_call.1} parent=1 // pred_region
      _
    $region5: #{tpu_custom_call.1} parent=1 // pred_fallthru
      _
    // Predicated region
    $region6: #{tpu_custom_call.1} parent=1 // pred_check
      _
    $region7: #{tpu_custom_call.1} parent=1 // pred_check_branch
      %17 = sbr.rel (0) target = $region9
    $region8: #{tpu_custom_call.1} parent=1 // pred_region
      _
    $region9: #{tpu_custom_call.1} parent=1 // pred_fallthru
      _
    // Predicated region
    $region10: #{tpu_custom_call.1} parent=1 // pred_check
      _
    $region11: #{tpu_custom_call.1} parent=1 // pred_check_branch
      %19 = sbr.rel (0) target = $region13
    $region12: #{tpu_custom_call.1} parent=1 // pred_region
      _
    $region13: #{tpu_custom_call.1} parent=1 // pred_fallthru
      _
    // Predicated region
    $region14: #{tpu_custom_call.1} parent=1 // pred_check
      _
    $region15: #{tpu_custom_call.1} parent=1 // pred_check_branch
      %21 = sbr.rel (0) target = $region17
    $region16: #{tpu_custom_call.1} parent=1 // pred_region
      _
    $region17: #{tpu_custom_call.1} parent=1 // pred_fallthru
      _
    // Predicated region
    $region18: #{tpu_custom_call.1} parent=1 // pred_check
      _
    $region19: #{tpu_custom_call.1} parent=1 // pred_check_branch
      %23 = sbr.rel (0) target = $region21
    $region20: #{tpu_custom_call.1} parent=1 // pred_region
      _
    $region21: #{tpu_custom_call.1} parent=1 // pred_fallthru
      _
    // Predicated region
    $region22: #{tpu_custom_call.1} parent=1 // pred_check
      _
    $region23: #{tpu_custom_call.1} parent=1 // pred_check_branch
      %25 = sbr.rel (0) target = $region25
    $region24: #{tpu_custom_call.1} parent=1 // pred_region
      _
    $region25: #{tpu_custom_call.1} parent=1 // pred_fallthru
      _
    %v26 = vld [vmem:[%s1] sm:$0xff]
    %v27 = vld [vmem:[%s1 + $0x8] sm:$0xff]
    %v28 = vld [vmem:[%s1 + $0x10] sm:$0xff]
    %v29 = vld [vmem:[%s1 + $0x18] sm:$0xff]
    %v30 = vld [vmem:[%s2] sm:$0xff]
    %v31 = vld [vmem:[%s2 + $0x8] sm:$0xff]
    %v32 = vld [vmem:[%s2 + $0x10] sm:$0xff]
    %v33 = vld [vmem:[%s2 + $0x18] sm:$0xff]
    %v34 = vld [vmem:[%s3] sm:$0xff]
    %v35 = vld [vmem:[%s3 + $0x8] sm:$0xff]
    %v36 = vld [vmem:[%s3 + $0x10] sm:$0xff]
    %v37 = vld [vmem:[%s3 + $0x18] sm:$0xff]
    %v38 = vld [vmem:[#allocation2] sm:$0x1]
    %v39 = vld [vmem:[%s0] sm:$0x1]
    %41 = vset.pattern.permute.xlu0 0
    %42 = vperm.xlu0 %41, %v26
    %v43 = vpop.permute.xlu0 %42
    %46 = vset.pattern.permute.xlu0 0
    %47 = vperm.xlu0 %46, %v27
    %v48 = vpop.permute.xlu0 %47
    %51 = vset.pattern.permute.xlu0 0
    %52 = vperm.xlu0 %51, %v28
    %v53 = vpop.permute.xlu0 %52
    %56 = vset.pattern.permute.xlu0 0
    %57 = vperm.xlu0 %56, %v29
    %v58 = vpop.permute.xlu0 %57
    %v61 = vlaneseq
    %v62 = vshrl.u32 %v61, 7
    %v63 = vsub.s32 0, %v62
    %v64 = vrot.slane %v39, %v63
    %v66 = vmul.f32 %v43, %v64
    %v67 = vmul.f32 %v48, %v64
    %v68 = vmul.f32 %v53, %v64
    %v69 = vmul.f32 %v58, %v64
    %71 = vset.pattern.permute.xlu0 0
    %72 = vperm.xlu0 %71, %v30
    %v73 = vpop.permute.xlu0 %72
    %76 = vset.pattern.permute.xlu0 0
    %77 = vperm.xlu0 %76, %v31
    %v78 = vpop.permute.xlu0 %77
    %81 = vset.pattern.permute.xlu0 0
    %82 = vperm.xlu0 %81, %v32
    %v83 = vpop.permute.xlu0 %82
    %86 = vset.pattern.permute.xlu0 0
    %87 = vperm.xlu0 %86, %v33
    %v88 = vpop.permute.xlu0 %87
    %v90 = vadd.f32 %v66, %v73
    %v91 = vadd.f32 %v67, %v78
    %v92 = vadd.f32 %v68, %v83
    %v93 = vadd.f32 %v69, %v88
    %v94 = vmax.f32 %v90, 0.0
    %v95 = vmax.f32 %v91, 0.0
    %v96 = vmax.f32 %v92, 0.0
    %v97 = vmax.f32 %v93, 0.0
    %v98 = vld [vmem:[%s5] sm:$0xff]
    %v99 = vld [vmem:[%s5 + $0x8] sm:$0xff]
    %v100 = vld [vmem:[%s5 + $0x10] sm:$0xff]
    %v101 = vld [vmem:[%s5 + $0x18] sm:$0xff]
    %s102 = scalar_lea.vmem %s2, 32
    %v103 = vld [vmem:[%s102] sm:$0xff]
    %v104 = vld [vmem:[%s102 + $0x8] sm:$0xff]
    %v105 = vld [vmem:[%s102 + $0x10] sm:$0xff]
    %v106 = vld [vmem:[%s102 + $0x18] sm:$0xff]
    %108 = vset.pattern.permute.xlu0 0
    %109 = vperm.xlu0 %108, %v103
    %v110 = vpop.permute.xlu0 %109
    %113 = vset.pattern.permute.xlu0 0
    %114 = vperm.xlu0 %113, %v104
    %v115 = vpop.permute.xlu0 %114
    %118 = vset.pattern.permute.xlu0 0
    %119 = vperm.xlu0 %118, %v105
    %v120 = vpop.permute.xlu0 %119
    %123 = vset.pattern.permute.xlu0 0
    %124 = vperm.xlu0 %123, %v106
    %v125 = vpop.permute.xlu0 %124
    %vm127 = vcmask 261120
    %v129 = vsel %vm127, %v98, 0
    %v132 = vsel %vm127, %v99, 0
    %v135 = vsel %vm127, %v100, 0
    %v138 = vsel %vm127, %v101, 0
    %140 = vmatprep.subr.mxu0 0.0
    %141 = vmatpush1.msra.mxu0 %v94
    %142 = vmatprep.subr.mxu0 0.0
    %143 = vmatpush1.msra.mxu0 %v95
    %144 = vmatprep.subr.mxu0 0.0
    %145 = vmatpush1.msra.mxu0 %v96
    %146 = vmatprep.subr.mxu0 0.0
    %147 = vmatpush1.msra.mxu0 %v97
    %148 = vmatprep.subr.mxu0 0.0
    %149 = vmatpush1.msra.mxu0 0.0
    %150 = vmatprep.subr.mxu0 0.0
    %151 = vmatpush1.msra.mxu0 0.0
    %152 = vmatprep.subr.mxu0 0.0
    %153 = vmatpush1.msra.mxu0 0.0
    %154 = vmatprep.subr.mxu0 0.0
    %155 = vmatpush1.msra.mxu0 0.0
    %156 = vmatprep.subr.mxu0 0.0
    %157 = vmatpush1.msra.mxu0 0.0
    %158 = vmatprep.subr.mxu0 0.0
    %159 = vmatpush1.msra.mxu0 0.0
    %160 = vmatprep.subr.mxu0 0.0
    %161 = vmatpush1.msra.mxu0 0.0
    %162 = vmatprep.subr.mxu0 0.0
    %163 = vmatpush1.msra.mxu0 0.0
    %164 = vmatprep.subr.mxu0 0.0
    %165 = vmatpush1.msra.mxu0 0.0
    %166 = vmatprep.subr.mxu0 0.0
    %167 = vmatpush1.msra.mxu0 0.0
    %168 = vmatprep.subr.mxu0 0.0
    %169 = vmatpush1.msra.mxu0 0.0
    %170 = vmatprep.subr.mxu0 0.0
    %171 = vmatpush1.msra.mxu0 0.0
    %172 = vmatprep.subr.mxu0 0.0
    %173 = vmatpush1.msra.mxu0 0.0
    %174 = vmatprep.subr.mxu0 0.0
    %175 = vmatpush1.msra.mxu0 0.0
    %176 = vmatprep.subr.mxu0 0.0
    %177 = vmatpush1.msra.mxu0 0.0
    %178 = vmatprep.subr.mxu0 0.0
    %179 = vmatpush1.msra.mxu0 0.0
    %180 = vmatprep.subr.mxu0 0.0
    %181 = vmatpush1.msra.mxu0 0.0
    %182 = vmatprep.subr.mxu0 0.0
    %183 = vmatpush1.msra.mxu0 0.0
    %184 = vmatprep.subr.mxu0 0.0
    %185 = vmatpush1.msra.mxu0 0.0
    %186 = vmatprep.subr.mxu0 0.0
    %187 = vmatpush1.msra.mxu0 0.0
    %188 = vmatprep.subr.mxu0 0.0
    %189 = vmatpush1.msra.mxu0 0.0
    %190 = vmatprep.subr.mxu0 0.0
    %191 = vmatpush1.msra.mxu0 0.0
    %192 = vmatprep.subr.mxu0 0.0
    %193 = vmatpush1.msra.mxu0 0.0
    %194 = vmatprep.subr.mxu0 0.0
    %195 = vmatpush1.msra.mxu0 0.0
    %196 = vmatprep.subr.mxu0 0.0
    %197 = vmatpush1.msra.mxu0 0.0
    %198 = vmatprep.subr.mxu0 0.0
    %199 = vmatpush1.msra.mxu0 0.0
    %200 = vmatprep.subr.mxu0 0.0
    %201 = vmatpush1.msra.mxu0 0.0
    %202 = vmatprep.subr.mxu0 0.0
    %203 = vmatpush1.msra.mxu0 0.0
    %204 = vmatprep.mubr.f32.mxu0 0.0
    %205 = vmatmul.mubr.f32.gmra.mrb[0].mxu0 %v129
    %v206 = vpop.f32.mrb[0].mxu0
    %v207 = vadd.f32 %v110, %v206
    %v208 = vpop.f32.mrb[0].mxu0
    %209 = vmatprep.mubr.f32.mxu0 0.0
    %210 = vmatmul.mubr.f32.gmra.mrb[0].mxu0 %v132
    %v211 = vpop.f32.mrb[0].mxu0
    %v212 = vadd.f32 %v115, %v211
    %v213 = vpop.f32.mrb[0].mxu0
    %214 = vmatprep.mubr.f32.mxu0 0.0
    %215 = vmatmul.mubr.f32.gmra.mrb[0].mxu0 %v135
    %v216 = vpop.f32.mrb[0].mxu0
    %v217 = vadd.f32 %v120, %v216
    %v218 = vpop.f32.mrb[0].mxu0
    %219 = vmatprep.mubr.f32.mxu0 0.0
    %220 = vmatmul.mubr.f32.gmra.mrb[0].mxu0 %v138
    %v221 = vpop.f32.mrb[0].mxu0
    %v222 = vadd.f32 %v125, %v221
    %v223 = vpop.f32.mrb[0].mxu0
    %224 = vdwg.mxu0
    %v225 = vmax.f32 %v207, 0.0
    %v226 = vmax.f32 %v212, 0.0
    %v227 = vmax.f32 %v217, 0.0
    %v228 = vmax.f32 %v222, 0.0
    %230 = vset.pattern.permute.xlu0 0
    %231 = vperm.xlu0 %230, %v34
    %v232 = vpop.permute.xlu0 %231
    %235 = vset.pattern.permute.xlu0 0
    %236 = vperm.xlu0 %235, %v35
    %v237 = vpop.permute.xlu0 %236
    %240 = vset.pattern.permute.xlu0 0
    %241 = vperm.xlu0 %240, %v36
    %v242 = vpop.permute.xlu0 %241
    %245 = vset.pattern.permute.xlu0 0
    %246 = vperm.xlu0 %245, %v37
    %v247 = vpop.permute.xlu0 %246
    %v249 = vmul.f32 %v232, %v225
    %v250 = vmul.f32 %v237, %v226
    %v251 = vmul.f32 %v242, %v227
    %v252 = vmul.f32 %v247, %v228
    %v253 = vadd.f32 %v249, %v250
    %v254 = vadd.f32 %v253, %v251
    %v255 = vadd.f32 %v254, %v252
    %v256 = vrot.slane %v255, 4
    %v257 = vadd.f32 %v255, %v256
    %v258 = vrot.slane %v257, 2
    %v259 = vadd.f32 %v257, %v258
    %v260 = vrot.slane %v259, 1
    %v261 = vadd.f32 %v259, %v260
    %263 = vset.pattern.permute.xlu0 0
    %264 = vperm.xlu0 %263, %v38
    %v265 = vpop.permute.xlu0 %264
    %v267 = vlaneseq
    %v268 = vshrl.u32 %v267, 7
    %v269 = vsub.s32 0, %v268
    %v270 = vrot.slane %v265, %v269
    %v271 = vadd.f32 %v261, %v270
    %v272 = vxor.u32 %v271, 2147483648
    %v273 = vmul.f32 %v272, 1.442695
    %v274 = vpow.pop %v273
    %v275 = vadd.f32 %v274, 1.0
    %v276 = vrcp.pop %v275
    %v277 = vmul.f32 1.0, %v276
    %278 = vst [vmem:[#allocation3] sm:$0x1] %v277
    // Predicated region
    $region26: #{tpu_custom_call.1} parent=1 // pred_check
      _
    $region27: #{tpu_custom_call.1} parent=1 // pred_check_branch
      %280 = sbr.rel (0) target = $region29
    $region28: #{tpu_custom_call.1} parent=1 // pred_region
      %s282 = ssub.s32 16, 16
      %283 = vsyncadd [#allocation4], %s282
      %s285 = sshll.u32 [#allocation3], 4
      %s286 = int_to_ptr.vmem [resolvable:$true] %s285
      %288 = dma.vmem_to_hbm [thread:$0]  %s286, 16, %s6, [#allocation4]
    $region29: #{tpu_custom_call.1} parent=1 // pred_fallthru
      _
    // Predicated region
    $region30: #{tpu_custom_call.1} parent=1 // pred_check
      _
    $region31: #{tpu_custom_call.1} parent=1 // pred_check_branch
      %290 = sbr.rel (0) target = $region33
    $region32: #{tpu_custom_call.1} parent=1 // pred_region
      %291 = dma.done [#allocation4], 16
    $region33: #{tpu_custom_call.1} parent=1 // pred_fallthru
      _
    %292 = vsyncpa [#allocation4], 1

</llo_original>
